<compile_context>
chip_gen: v7x
topology: tpu7x:2x2x1
jax: 0.10.0
libtpu: 0.0.40
codegen_flags: <defaults>
</compile_context>

<pallas_src>
import jax
import jax.numpy as jnp
from jax.experimental import pallas as pl
from jax.experimental.pallas import tpu as pltpu


def _round_up(x, m):
    return ((x + m - 1) // m) * m


def _chip_config():
    """Return (num_tensorcores_per_chip, vmem_limit_bytes), conservative on failure."""
    kind = ""
    try:
        kind = jax.devices()[0].device_kind.lower()
    except Exception:
        pass
    num_tc = 2 if ("v7" in kind or "tpu7" in kind) else 1
    try:
        vmem_cap = int(pltpu.get_tpu_info().vmem_capacity_bytes)
    except Exception:
        vmem_cap = 64 << 20        # v7x physical VMEM per TC: safe lower bound
    vmem_limit = min(int(vmem_cap * 3 // 4), 96 << 20)
    return num_tc, vmem_limit


def st_bilinear_message_passing(feature, mask_bool, params, T=3,
                                compute_dtype=jnp.bfloat16):
    """feature: [B*T, N, E] float32, mask_bool: [B, T*N, T*N] bool (True => masked)."""
    BT, N, E = feature.shape
    B = BT // T
    TN = T * N
    M = params["We2_w"].shape[0]
    Ep = _round_up(E, 128)          # lane-aligned column-block widths
    Mp = _round_up(M, 128)
    W = 2 * Ep + Mp

    num_tc, vmem_limit = _chip_config()

    # ---- fold w_a into U and fuse [U*w_a | V | We2] into one lane-aligned matrix ----
    w_a = params["w_a"].reshape(1, E).astype(jnp.float32)

    def padc(a, width):             # zero-pad columns to a 128-lane boundary
        return jnp.pad(a, ((0, 0), (0, width - a.shape[1])))

    u_wt = params["U_w"].T.astype(jnp.float32) * w_a            # [E, E]
    v_wt = params["V_w"].T.astype(jnp.float32)                  # [E, E]
    we2_t = params["We2_w"].T.astype(jnp.float32)               # [E, M]
    wf = jnp.concatenate([padc(u_wt, Ep), padc(v_wt, Ep), padc(we2_t, Mp)],
                         axis=1).astype(compute_dtype)          # [E, W]
    bf = jnp.concatenate(
        [padc(params["U_b"].reshape(1, E).astype(jnp.float32) * w_a, Ep),
         padc(params["V_b"].reshape(1, E).astype(jnp.float32), Ep),
         jnp.zeros((1, Mp), jnp.float32)], axis=1)              # [1, W]
    we1_t = params["We1_w"].T.astype(compute_dtype)             # [M, E]
    ln_g = params["ln_g"].reshape(1, M).astype(jnp.float32)
    ln_b = params["ln_b"].reshape(1, M).astype(jnp.float32)

    # ---- chip-aware batch blocking (VMEM-budgeted; split only when 2 TCs exist) ----
    per_b = (2 * TN * E * 4        # feature in (double-buffered)
             + 2 * TN * TN * 1     # int8 mask in (double-buffered)
             + 2 * TN * E * 4      # output (double-buffered)
             + TN * W * 4          # fused projection
             + 2 * TN * Ep * 4     # f_u / f_v
             + 3 * TN * TN * 4     # uv / exp / softmax intermediates
             + 4 * TN * M * 4)     # f_e / layernorm intermediates
    blk = max(1, min(B, (vmem_limit // 2) // max(per_b, 1)))
    if num_tc >= 2 and B >= 2:
        blk = min(blk, -(-B // 2))  # keep >= 2 grid steps for the 2 TensorCores
    grid_b = -(-B // blk)
    b_pad = grid_b * blk

    f2d = feature.reshape(B * TN, E).astype(jnp.float32)
    mask_i8 = mask_bool.astype(jnp.int8)
    if b_pad != B:
        f2d = jnp.pad(f2d, ((0, (b_pad - B) * TN), (0, 0)))
        mask_i8 = jnp.pad(mask_i8, ((0, b_pad - B), (0, 0), (0, 0)))

    def kernel(f_ref, mask_ref, wf_ref, bf_ref, we1_ref, g_ref, beta_ref, out_ref):
        cdt = wf_ref.dtype

        f2 = f_ref[...]                                            # [blk*TN, E] f32
        # Fused projection: one wide, lane-aligned matmul.
        proj = jnp.dot(f2.astype(cdt), wf_ref[...],
                       preferred_element_type=jnp.float32) + bf_ref[...]   # [blk*TN, W]

        # Padded columns of U/V blocks are exactly zero -> contraction unchanged.
        f_u = proj[:, :Ep].reshape(blk, TN, Ep)                    # U(f) * w_a
        f_v = proj[:, Ep:2 * Ep].reshape(blk, TN, Ep)              # V(f)
        f_w = proj[:, 2 * Ep:2 * Ep + M].reshape(blk, TN, M)       # We2(f)

        # UV = (U(f)*w_a) @ V(f)^T, batched (contract E directly, no transpose).
        uv = jnp.einsum('bie,bje->bij', f_u.astype(cdt), f_v.astype(cdt),
                        preferred_element_type=jnp.float32)        # [blk, TN, TN]
        # Masking in-kernel from the 1-byte mask (VPU compare + select).
        uv = jnp.where(mask_ref[...] != 0, jnp.float32(-1e30), uv)

        # Softmax over last axis; approx reciprocal on EUP (LayerNorm cancels scale).
        m = jnp.max(uv, axis=-1, keepdims=True)
        e = jnp.exp(uv - m)
        p = e * pl.reciprocal(jnp.sum(e, axis=-1, keepdims=True), approx=True)

        # feature_e = softmax(UV) @ We2(feature)
        f_e = jnp.einsum('bij,bjm->bim', p.astype(cdt), f_w.astype(cdt),
                         preferred_element_type=jnp.float32)       # [blk, TN, M]

        # LayerNorm over message dim (eps=1e-5), then ReLU (all f32).
        mu = jnp.mean(f_e, axis=-1, keepdims=True)
        var = jnp.mean((f_e - mu) ** 2, axis=-1, keepdims=True)
        f_n = (f_e - mu) * jax.lax.rsqrt(var + 1e-5)
        f_n = f_n * g_ref[...] + beta_ref[...]
        f_r = jnp.maximum(f_n, 0.0)

        # feature_out = We1(relu(ln(feature_e)))  -> direct 2-D store, no reshape.
        out_ref[...] = jnp.dot(f_r.reshape(blk * TN, M).astype(cdt), we1_ref[...],
                               preferred_element_type=jnp.float32)  # [blk*TN, E]

    out = pl.pallas_call(
        kernel,
        out_shape=jax.ShapeDtypeStruct((b_pad * TN, E), jnp.float32),
        grid=(grid_b,),
        in_specs=[
            pl.BlockSpec((blk * TN, E), lambda b: (b, 0)),      # features (2-D slab)
            pl.BlockSpec((blk, TN, TN), lambda b: (b, 0, 0)),   # int8 mask
            pl.BlockSpec((E, W), lambda b: (0, 0)),             # fused weights
            pl.BlockSpec((1, W), lambda b: (0, 0)),             # fused bias
            pl.BlockSpec((M, E), lambda b: (0, 0)),             # We1^T
            pl.BlockSpec((1, M), lambda b: (0, 0)),             # LN gamma
            pl.BlockSpec((1, M), lambda b: (0, 0)),             # LN beta
        ],
        out_specs=pl.BlockSpec((blk * TN, E), lambda b: (b, 0)),
        compiler_params=pltpu.CompilerParams(
            dimension_semantics=("parallel",),
            vmem_limit_bytes=vmem_limit),
    )(f2d, mask_i8, wf, bf, we1_t, ln_g, ln_b)

    return out[:B * TN].reshape(BT, N, E)


def init_params(key, emb_fea_num, message_fea_num):
    """Deterministic synthetic parameter init (shapes match the PyTorch module)."""
    E, M = emb_fea_num, message_fea_num
    ks = jax.random.split(key, 7)
    lin = lambda k, o, i: jax.random.uniform(k, (o, i), jnp.float32,
                                             -1.0 / jnp.sqrt(i), 1.0 / jnp.sqrt(i))
    return {
        "U_w": lin(ks[0], E, E),
        "U_b": jax.random.uniform(ks[1], (E,), jnp.float32, -1.0 / jnp.sqrt(E), 1.0 / jnp.sqrt(E)),
        "V_w": lin(ks[2], E, E),
        "V_b": jax.random.uniform(ks[3], (E,), jnp.float32, -1.0 / jnp.sqrt(E), 1.0 / jnp.sqrt(E)),
        # kaiming_normal_ on a [1, E] tensor: std = sqrt(2 / E)
        "w_a": jax.random.normal(ks[4], (1, E), jnp.float32) * jnp.sqrt(2.0 / E),
        "We2_w": lin(ks[5], M, E),     # Linear(E -> M, bias=False)
        "We1_w": lin(ks[6], E, M),     # Linear(M -> E, bias=False)
        "ln_g": jnp.ones((M,), jnp.float32),
        "ln_b": jnp.zeros((M,), jnp.float32),
    }


def _reference(feature, mask_bool, params, T=3):
    """Pure-JAX reference mirroring the PyTorch forward, for validation."""
    BT, N, E = feature.shape
    B = BT // T
    f = feature.reshape(B, T * N, E)
    f_u = f @ params["U_w"].T + params["U_b"]
    f_v = f @ params["V_w"].T + params["V_b"]
    f_u = f_u * params["w_a"]
    uv = jnp.einsum("bie,bje->bij", f_u, f_v)
    uv = jnp.where(mask_bool, -jnp.inf, uv)
    p = jax.nn.softmax(uv, axis=2)
    f_w = f @ params["We2_w"].T
    f_e = jnp.einsum("bij,bjm->bim", p, f_w)
    mu = jnp.mean(f_e, axis=-1, keepdims=True)
    var = jnp.mean((f_e - mu) ** 2, axis=-1, keepdims=True)
    f_n = (f_e - mu) / jnp.sqrt(var + 1e-5) * params["ln_g"] + params["ln_b"]
    f_r = jnp.maximum(f_n, 0.0)
    out = f_r @ params["We1_w"].T
    return out.reshape(BT, N, E)


if __name__ == "__main__":
    B, T, N = 2, 3, 8
    E, M = 32, 16          # emb_fea_num, message_fea_num
    TN = T * N

    key = jax.random.PRNGKey(0)
    k_feat, k_mask, k_param = jax.random.split(key, 3)

    feature = jax.random.normal(k_feat, (B * T, N, E), jnp.float32)
    # Random boolean mask; keep the diagonal unmasked so no softmax row is fully masked.
    mask = jax.random.uniform(k_mask, (B, TN, TN)) < 0.3
    mask = mask & (~jnp.eye(TN, dtype=bool)[None, :, :])

    params = init_params(k_param, E, M)
    ref = _reference(feature, mask, params, T=T)

    # Strict-accuracy path (f32 MXU operands) — validates exact forward semantics.
    out_f32 = jax.block_until_ready(
        st_bilinear_message_passing(feature, mask, params, T=T,
                                    compute_dtype=jnp.float32))
    assert out_f32.shape == (B * T, N, E)
    assert jnp.allclose(out_f32, ref, atol=1e-4, rtol=1e-4), "f32 kernel mismatch vs reference"

    # Fast path (bf16 MXU operands, f32 accumulate, f32 elementwise) — looser tolerance.
    out_bf16 = jax.block_until_ready(
        st_bilinear_message_passing(feature, mask, params, T=T,
                                    compute_dtype=jnp.bfloat16))
    assert out_bf16.shape == (B * T, N, E)
    assert jnp.allclose(out_bf16, ref, atol=1e-1, rtol=1e-1), "bf16 kernel mismatch vs reference"

    print("KERNEL_OK")
</pallas_src>

<mosaic_0001>
module attributes {stable_mosaic.version = 11 : i64} {
  func.func @kernel(%arg0: i32, %arg1: memref<48x32xf32, #tpu.memory_space<vmem>>, %arg2: memref<2x24x24xi8, #tpu.memory_space<vmem>>, %arg3: memref<32x384xf32, #tpu.memory_space<vmem>>, %arg4: memref<1x384xf32, #tpu.memory_space<vmem>>, %arg5: memref<16x32xf32, #tpu.memory_space<vmem>>, %arg6: memref<1x16xf32, #tpu.memory_space<vmem>>, %arg7: memref<1x16xf32, #tpu.memory_space<vmem>>, %arg8: memref<48x32xf32, #tpu.memory_space<vmem>>) attributes {dimension_semantics = [#tpu.dimension_semantics<parallel>], iteration_bounds = array<i64: 1>, scalar_prefetch = 0 : i64, scratch_operands = 0 : i64, tpu.core_type = #tpu.core_type<tc>, window_params = [{transform_indices = @transform_0, window_bounds = array<i64: 48, 32>}, {transform_indices = @transform_1, window_bounds = array<i64: 2, 24, 24>}, {pipeline_mode = #tpu.pipeline_mode<synchronous>, transform_indices = @transform_2, window_bounds = array<i64: 32, 384>}, {pipeline_mode = #tpu.pipeline_mode<synchronous>, transform_indices = @transform_3, window_bounds = array<i64: 1, 384>}, {pipeline_mode = #tpu.pipeline_mode<synchronous>, transform_indices = @transform_4, window_bounds = array<i64: 16, 32>}, {pipeline_mode = #tpu.pipeline_mode<synchronous>, transform_indices = @transform_5, window_bounds = array<i64: 1, 16>}, {pipeline_mode = #tpu.pipeline_mode<synchronous>, transform_indices = @transform_6, window_bounds = array<i64: 1, 16>}, {transform_indices = @transform_7, window_bounds = array<i64: 48, 32>}]} {
    %c0 = arith.constant 0 : index
    %c0_0 = arith.constant 0 : index
    %0 = vector.load %arg1[%c0, %c0_0] : memref<48x32xf32, #tpu.memory_space<vmem>>, vector<48x32xf32>
    %c0_1 = arith.constant 0 : index
    %c0_2 = arith.constant 0 : index
    %1 = vector.load %arg3[%c0_1, %c0_2] : memref<32x384xf32, #tpu.memory_space<vmem>>, vector<32x384xf32>
    %cst = arith.constant dense<0.000000e+00> : vector<48x384xf32>
    %2 = tpu.matmul %0, %1, %cst {dimension_numbers = #tpu.dot_dimension_numbers<[1], [0], [0], [1], [0, 0, 1, 1], [], []>} : vector<48x32xf32>, vector<32x384xf32>, vector<48x384xf32> -> vector<48x384xf32>
    %c0_3 = arith.constant 0 : index
    %c0_4 = arith.constant 0 : index
    %3 = vector.load %arg4[%c0_3, %c0_4] : memref<1x384xf32, #tpu.memory_space<vmem>>, vector<1x384xf32>
    %4 = vector.broadcast %3 : vector<1x384xf32> to vector<48x384xf32>
    %5 = arith.addf %2, %4 : vector<48x384xf32>
    %6 = vector.extract_strided_slice %5 {offsets = [0, 0], sizes = [48, 128], strides = [1, 1]} : vector<48x384xf32> to vector<48x128xf32>
    %7 = vector.shape_cast %6 : vector<48x128xf32> to vector<2x24x128xf32>
    %8 = vector.extract_strided_slice %5 {offsets = [0, 128], sizes = [48, 128], strides = [1, 1]} : vector<48x384xf32> to vector<48x128xf32>
    %9 = vector.shape_cast %8 : vector<48x128xf32> to vector<2x24x128xf32>
    %10 = vector.extract_strided_slice %5 {offsets = [0, 256], sizes = [48, 16], strides = [1, 1]} : vector<48x384xf32> to vector<48x16xf32>
    %11 = vector.shape_cast %10 : vector<48x16xf32> to vector<2x24x16xf32>
    "tpu.trace_start"() <{level = 10 : i32, message = "bie,bje->bij"}> : () -> ()
    %cst_5 = arith.constant dense<0.000000e+00> : vector<2x24x24xf32>
    %12 = tpu.matmul %7, %9, %cst_5 {dimension_numbers = #tpu.dot_dimension_numbers<[2], [2], [1], [1], [0, 0, 0, 1, 1, 1], [0], [0]>} : vector<2x24x128xf32>, vector<2x24x128xf32>, vector<2x24x24xf32> -> vector<2x24x24xf32>
    "tpu.trace_stop"() : () -> ()
    %c0_6 = arith.constant 0 : index
    %c0_7 = arith.constant 0 : index
    %c0_8 = arith.constant 0 : index
    %13 = vector.load %arg2[%c0_6, %c0_7, %c0_8] : memref<2x24x24xi8, #tpu.memory_space<vmem>>, vector<2x24x24xi8>
    %c0_i8 = arith.constant 0 : i8
    %14 = vector.broadcast %c0_i8 : i8 to vector<2x24x24xi8>
    %15 = arith.cmpi ne, %13, %14 : vector<2x24x24xi8>
    %cst_9 = arith.constant -1.000000e+30 : f32
    %16 = vector.broadcast %cst_9 : f32 to vector<2x24x24xf32>
    %17 = arith.select %15, %16, %12 : vector<2x24x24xi1>, vector<2x24x24xf32>
    %cst_10 = arith.constant dense<0xFF800000> : vector<2x24xf32>
    %18 = vector.multi_reduction <maximumf>, %17, %cst_10 [2] : vector<2x24x24xf32> to vector<2x24xf32>
    %19 = vector.shape_cast %18 : vector<2x24xf32> to vector<2x24x1xf32>
    %20 = vector.broadcast %19 : vector<2x24x1xf32> to vector<2x24x24xf32>
    %21 = arith.subf %17, %20 : vector<2x24x24xf32>
    %22 = math.exp %21 : vector<2x24x24xf32>
    %cst_11 = arith.constant dense<0.000000e+00> : vector<2x24xf32>
    %23 = vector.multi_reduction <add>, %22, %cst_11 [2] : vector<2x24x24xf32> to vector<2x24xf32>
    %24 = vector.shape_cast %23 : vector<2x24xf32> to vector<2x24x1xf32>
    %25 = tpu.reciprocal %24 {approx = true} : vector<2x24x1xf32> -> vector<2x24x1xf32>
    %26 = vector.broadcast %25 : vector<2x24x1xf32> to vector<2x24x24xf32>
    %27 = arith.mulf %22, %26 : vector<2x24x24xf32>
    "tpu.trace_start"() <{level = 10 : i32, message = "bij,bjm->bim"}> : () -> ()
    %cst_12 = arith.constant dense<0.000000e+00> : vector<2x24x16xf32>
    %28 = tpu.matmul %27, %11, %cst_12 {dimension_numbers = #tpu.dot_dimension_numbers<[2], [1], [1], [2], [0, 0, 0, 1, 1, 2], [0], [0]>} : vector<2x24x24xf32>, vector<2x24x16xf32>, vector<2x24x16xf32> -> vector<2x24x16xf32>
    "tpu.trace_stop"() : () -> ()
    %cst_13 = arith.constant dense<0.000000e+00> : vector<2x24xf32>
    %29 = vector.multi_reduction <add>, %28, %cst_13 [2] : vector<2x24x16xf32> to vector<2x24xf32>
    %30 = vector.shape_cast %29 : vector<2x24xf32> to vector<2x24x1xf32>
    %cst_14 = arith.constant 1.600000e+01 : f32
    %31 = vector.broadcast %cst_14 : f32 to vector<2x24x1xf32>
    %32 = arith.divf %30, %31 : vector<2x24x1xf32>
    %33 = vector.broadcast %32 : vector<2x24x1xf32> to vector<2x24x16xf32>
    %34 = arith.subf %28, %33 : vector<2x24x16xf32>
    %35 = arith.mulf %34, %34 : vector<2x24x16xf32>
    %cst_15 = arith.constant dense<0.000000e+00> : vector<2x24xf32>
    %36 = vector.multi_reduction <add>, %35, %cst_15 [2] : vector<2x24x16xf32> to vector<2x24xf32>
    %37 = vector.shape_cast %36 : vector<2x24xf32> to vector<2x24x1xf32>
    %cst_16 = arith.constant 1.600000e+01 : f32
    %38 = vector.broadcast %cst_16 : f32 to vector<2x24x1xf32>
    %39 = arith.divf %37, %38 : vector<2x24x1xf32>
    %40 = vector.broadcast %32 : vector<2x24x1xf32> to vector<2x24x16xf32>
    %41 = arith.subf %28, %40 : vector<2x24x16xf32>
    %cst_17 = arith.constant 9.99999974E-6 : f32
    %42 = vector.broadcast %cst_17 : f32 to vector<2x24x1xf32>
    %43 = arith.addf %39, %42 : vector<2x24x1xf32>
    %44 = math.rsqrt %43 : vector<2x24x1xf32>
    %45 = vector.broadcast %44 : vector<2x24x1xf32> to vector<2x24x16xf32>
    %46 = arith.mulf %41, %45 : vector<2x24x16xf32>
    %c0_18 = arith.constant 0 : index
    %c0_19 = arith.constant 0 : index
    %47 = vector.load %arg6[%c0_18, %c0_19] : memref<1x16xf32, #tpu.memory_space<vmem>>, vector<1x16xf32>
    %48 = vector.shape_cast %47 : vector<1x16xf32> to vector<1x1x16xf32>
    %49 = vector.broadcast %48 : vector<1x1x16xf32> to vector<2x24x16xf32>
    %50 = arith.mulf %46, %49 : vector<2x24x16xf32>
    %c0_20 = arith.constant 0 : index
    %c0_21 = arith.constant 0 : index
    %51 = vector.load %arg7[%c0_20, %c0_21] : memref<1x16xf32, #tpu.memory_space<vmem>>, vector<1x16xf32>
    %52 = vector.shape_cast %51 : vector<1x16xf32> to vector<1x1x16xf32>
    %53 = vector.broadcast %52 : vector<1x1x16xf32> to vector<2x24x16xf32>
    %54 = arith.addf %50, %53 : vector<2x24x16xf32>
    %cst_22 = arith.constant 0.000000e+00 : f32
    %55 = vector.broadcast %cst_22 : f32 to vector<2x24x16xf32>
    %56 = arith.maximumf %54, %55 : vector<2x24x16xf32>
    %57 = vector.shape_cast %56 : vector<2x24x16xf32> to vector<48x16xf32>
    %c0_23 = arith.constant 0 : index
    %c0_24 = arith.constant 0 : index
    %58 = vector.load %arg5[%c0_23, %c0_24] : memref<16x32xf32, #tpu.memory_space<vmem>>, vector<16x32xf32>
    %cst_25 = arith.constant dense<0.000000e+00> : vector<48x32xf32>
    %59 = tpu.matmul %57, %58, %cst_25 {dimension_numbers = #tpu.dot_dimension_numbers<[1], [0], [0], [1], [0, 0, 1, 1], [], []>} : vector<48x16xf32>, vector<16x32xf32>, vector<48x32xf32> -> vector<48x32xf32>
    %c0_26 = arith.constant 0 : index
    %c0_27 = arith.constant 0 : index
    %60 = vector.load %arg8[%c0_26, %c0_27] : memref<48x32xf32, #tpu.memory_space<vmem>>, vector<48x32xf32>
    tpu.vector_store %arg8[%c0_26, %c0_27], %59 {strides = array<i32>} : memref<48x32xf32, #tpu.memory_space<vmem>>, vector<48x32xf32>,
    return
  }
  func.func @transform_0(%arg0: i32) -> (i32, i32) {
    %c0_i32 = arith.constant 0 : i32
    %c0_i32_0 = arith.constant 0 : i32
    return %arg0, %c0_i32 : i32, i32
  }
  func.func @transform_1(%arg0: i32) -> (i32, i32, i32) {
    %c0_i32 = arith.constant 0 : i32
    %c0_i32_0 = arith.constant 0 : i32
    %c0_i32_1 = arith.constant 0 : i32
    return %arg0, %c0_i32, %c0_i32_0 : i32, i32, i32
  }
  func.func @transform_2(%arg0: i32) -> (i32, i32) {
    %c0_i32 = arith.constant 0 : i32
    %c0_i32_0 = arith.constant 0 : i32
    %c0_i32_1 = arith.constant 0 : i32
    return %c0_i32, %c0_i32_0 : i32, i32
  }
  func.func @transform_3(%arg0: i32) -> (i32, i32) {
    %c0_i32 = arith.constant 0 : i32
    %c0_i32_0 = arith.constant 0 : i32
    %c0_i32_1 = arith.constant 0 : i32
    return %c0_i32, %c0_i32_0 : i32, i32
  }
  func.func @transform_4(%arg0: i32) -> (i32, i32) {
    %c0_i32 = arith.constant 0 : i32
    %c0_i32_0 = arith.constant 0 : i32
    %c0_i32_1 = arith.constant 0 : i32
    return %c0_i32, %c0_i32_0 : i32, i32
  }
  func.func @transform_5(%arg0: i32) -> (i32, i32) {
    %c0_i32 = arith.constant 0 : i32
    %c0_i32_0 = arith.constant 0 : i32
    %c0_i32_1 = arith.constant 0 : i32
    return %c0_i32, %c0_i32_0 : i32, i32
  }
  func.func @transform_6(%arg0: i32) -> (i32, i32) {
    %c0_i32 = arith.constant 0 : i32
    %c0_i32_0 = arith.constant 0 : i32
    %c0_i32_1 = arith.constant 0 : i32
    return %c0_i32, %c0_i32_0 : i32, i32
  }
  func.func @transform_7(%arg0: i32) -> (i32, i32) {
    %c0_i32 = arith.constant 0 : i32
    %c0_i32_0 = arith.constant 0 : i32
    return %arg0, %c0_i32 : i32, i32
  }
}

</mosaic_0001>

<llo_original>
// kernel: tpu_custom_call.1
$region0: #{tpu_custom_call.1}
  #allocation0 [shape = 'u32[]', space=smem, size = 0x4, offset = 0x4, fixed_abs, tag = 'smem constant byte address 0x4 - core index']
  #allocation1 [shape = 'u32[144,128]{1,0:T(1,128)}', space=vmem, size = 0x12000, scoped, tag = 'internal scratch']
  %s0 = inlined_call_operand.vmem [shape: f32[48,32], index: 0, kind: input, shape index: {}]
  %s1 = inlined_call_operand.vmem [shape: s8[2,24,24], index: 1, kind: input, shape index: {}]
  %s2 = inlined_call_operand.hbm [shape: f32[32,384], index: 2, kind: input, shape index: {}]
  %s3 = inlined_call_operand.vmem [shape: f32[1,384], index: 3, kind: input, shape index: {}]
  %s4 = inlined_call_operand.vmem [shape: f32[16,32], index: 4, kind: input, shape index: {}]
  %s5 = inlined_call_operand.vmem [shape: f32[1,16], index: 5, kind: input, shape index: {}]
  %s6 = inlined_call_operand.vmem [shape: f32[1,16], index: 6, kind: input, shape index: {}]
  %s7 = inlined_call_operand.vmem [shape: f32[48,32], index: 7, kind: output, shape index: {}]
  %s8 = sld [smem:[#allocation0]]
  $region42: #{tpu_custom_call.1} parent=0
    _
  %s10 = ssub.s32 1, %s8
  %s11 = scalar_select 0, %s10, %s8
  $region1: #{tpu_custom_call.1} parent=0
    #allocation2 [shape = 'u8[49152]{0}', space=vmem, size = 0xc000, scoped, tag = 'input window, operand 2, single buffered']
    #allocation3 [shape = 's32[1]{0}', space=sflag, size = 0x4, scoped, tag = 'scoped memory for tpu_custom_call.1']
    %12 = vsyncpa [#allocation3], 0
    // Predicated region
    $region2: #{tpu_custom_call.1} parent=1 // pred_check
      _
    $region3: #{tpu_custom_call.1} parent=1 // pred_check_branch
      %14 = sbr.rel (0) target = $region5
    $region4: #{tpu_custom_call.1} parent=1 // pred_region
      _
    $region5: #{tpu_custom_call.1} parent=1 // pred_fallthru
      _
    // Predicated region
    $region6: #{tpu_custom_call.1} parent=1 // pred_check
      _
    $region7: #{tpu_custom_call.1} parent=1 // pred_check_branch
      %16 = sbr.rel (0) target = $region9
    $region8: #{tpu_custom_call.1} parent=1 // pred_region
      _
    $region9: #{tpu_custom_call.1} parent=1 // pred_fallthru
      _
    // Predicated region
    $region10: #{tpu_custom_call.1} parent=1 // pred_check
      _
    $region11: #{tpu_custom_call.1} parent=1 // pred_check_branch
      %18 = sbr.rel (0) target = $region13
    $region12: #{tpu_custom_call.1} parent=1 // pred_region
      %s20 = ssub.s32 1536, 1536
      %21 = vsyncadd [#allocation3], %s20
      %s22 = sshll.u32 [#allocation2], 4
      %s23 = int_to_ptr.vmem [resolvable:$true] %s22
      %28 = dma.hbm_to_vmem [thread:$0]  %s2, 1536, %s23, [#allocation3], 384, 384, 24
    $region13: #{tpu_custom_call.1} parent=1 // pred_fallthru
      _
    // Predicated region
    $region14: #{tpu_custom_call.1} parent=1 // pred_check
      _
    $region15: #{tpu_custom_call.1} parent=1 // pred_check_branch
      %30 = sbr.rel (0) target = $region17
    $region16: #{tpu_custom_call.1} parent=1 // pred_region
      _
    $region17: #{tpu_custom_call.1} parent=1 // pred_fallthru
      _
    // Predicated region
    $region18: #{tpu_custom_call.1} parent=1 // pred_check
      _
    $region19: #{tpu_custom_call.1} parent=1 // pred_check_branch
      %32 = sbr.rel (0) target = $region21
    $region20: #{tpu_custom_call.1} parent=1 // pred_region
      _
    $region21: #{tpu_custom_call.1} parent=1 // pred_fallthru
      _
    // Predicated region
    $region22: #{tpu_custom_call.1} parent=1 // pred_check
      _
    $region23: #{tpu_custom_call.1} parent=1 // pred_check_branch
      %34 = sbr.rel (0) target = $region25
    $region24: #{tpu_custom_call.1} parent=1 // pred_region
      _
    $region25: #{tpu_custom_call.1} parent=1 // pred_fallthru
      _
    // Predicated region
    $region26: #{tpu_custom_call.1} parent=1 // pred_check
      _
    $region27: #{tpu_custom_call.1} parent=1 // pred_check_branch
      %36 = sbr.rel (0) target = $region29
    $region28: #{tpu_custom_call.1} parent=1 // pred_region
      _
    $region29: #{tpu_custom_call.1} parent=1 // pred_fallthru
      _
    // Predicated region
    $region30: #{tpu_custom_call.1} parent=1 // pred_check
      _
    $region31: #{tpu_custom_call.1} parent=1 // pred_check_branch
      %38 = sbr.rel (0) target = $region33
    $region32: #{tpu_custom_call.1} parent=1 // pred_region
      %39 = dma.done [#allocation3], 1536
    $region33: #{tpu_custom_call.1} parent=1 // pred_fallthru
      _
    %v42 = vld [vmem:[%s0] sm:$0xff]
    %v43 = vld [vmem:[%s0 + $0x8] sm:$0xff]
    %v44 = vld [vmem:[%s0 + $0x10] sm:$0xff]
    %v45 = vld [vmem:[%s0 + $0x18] sm:$0xff]
    %v46 = vld [vmem:[%s0 + $0x20] sm:$0xff]
    %v47 = vld [vmem:[%s0 + $0x28] sm:$0xff]
    %v48 = vld [vmem:[#allocation2] sm:$0xff]
    %v49 = vld [vmem:[#allocation2 + $0x8] sm:$0xff]
    %v50 = vld [vmem:[#allocation2 + $0x10] sm:$0xff]
    %v51 = vld [vmem:[#allocation2 + $0x18] sm:$0xff]
    %v52 = vld [vmem:[#allocation2 + $0x20] sm:$0xff]
    %v53 = vld [vmem:[#allocation2 + $0x28] sm:$0xff]
    %v54 = vld [vmem:[#allocation2 + $0x30] sm:$0xff]
    %v55 = vld [vmem:[#allocation2 + $0x38] sm:$0xff]
    %v56 = vld [vmem:[#allocation2 + $0x40] sm:$0xff]
    %v57 = vld [vmem:[#allocation2 + $0x48] sm:$0xff]
    %v58 = vld [vmem:[#allocation2 + $0x50] sm:$0xff]
    %v59 = vld [vmem:[#allocation2 + $0x58] sm:$0xff]
    %v60 = vld [vmem:[%s3] sm:$0x7]
    %v62 = vlaneseq
    %v63 = vshrl.u32 %v62, 7
    %v64 = vsub.s32 0, %v63
    %v65 = vrot.slane %v60, %v64
    %v66 = vlaneseq
    %v67 = vshrl.u32 %v66, 7
    %v68 = vsub.s32 1, %v67
    %v69 = vrot.slane %v60, %v68
    %v70 = vlaneseq
    %v71 = vshrl.u32 %v70, 7
    %v72 = vsub.s32 2, %v71
    %v73 = vrot.slane %v60, %v72
    %vm77 = vcmask 261120
    %v79 = vsel %vm77, %v42, 0
    %v82 = vsel %vm77, %v43, 0
    %v85 = vsel %vm77, %v44, 0
    %v88 = vsel %vm77, %v45, 0
    %v91 = vsel %vm77, %v46, 0
    %v94 = vsel %vm77, %v47, 0
    %96 = vmatprep.subr.mxu0 %v49
    %97 = vmatpush1.msra.mxu0 %v48
    %98 = vmatprep.subr.mxu0 %v52
    %99 = vmatpush1.msra.mxu0 %v51
    %100 = vmatprep.subr.mxu0 %v55
    %101 = vmatpush1.msra.mxu0 %v54
    %102 = vmatprep.subr.mxu0 %v58
    %103 = vmatpush1.msra.mxu0 %v57
    %104 = vmatprep.subr.mxu0 0.0
    %105 = vmatpush1.msra.mxu0 0.0
    %106 = vmatprep.subr.mxu0 0.0
    %107 = vmatpush1.msra.mxu0 0.0
    %108 = vmatprep.subr.mxu0 0.0
    %109 = vmatpush1.msra.mxu0 0.0
    %110 = vmatprep.subr.mxu0 0.0
    %111 = vmatpush1.msra.mxu0 0.0
    %112 = vmatprep.subr.mxu0 0.0
    %113 = vmatpush1.msra.mxu0 0.0
    %114 = vmatprep.subr.mxu0 0.0
    %115 = vmatpush1.msra.mxu0 0.0
    %116 = vmatprep.subr.mxu0 0.0
    %117 = vmatpush1.msra.mxu0 0.0
    %118 = vmatprep.subr.mxu0 0.0
    %119 = vmatpush1.msra.mxu0 0.0
    %120 = vmatprep.subr.mxu0 0.0
    %121 = vmatpush1.msra.mxu0 0.0
    %122 = vmatprep.subr.mxu0 0.0
    %123 = vmatpush1.msra.mxu0 0.0
    %124 = vmatprep.subr.mxu0 0.0
    %125 = vmatpush1.msra.mxu0 0.0
    %126 = vmatprep.subr.mxu0 0.0
    %127 = vmatpush1.msra.mxu0 0.0
    %128 = vmatprep.subr.mxu0 0.0
    %129 = vmatpush1.msra.mxu0 0.0
    %130 = vmatprep.subr.mxu0 0.0
    %131 = vmatpush1.msra.mxu0 0.0
    %132 = vmatprep.subr.mxu0 0.0
    %133 = vmatpush1.msra.mxu0 0.0
    %134 = vmatprep.subr.mxu0 0.0
    %135 = vmatpush1.msra.mxu0 0.0
    %136 = vmatprep.subr.mxu0 0.0
    %137 = vmatpush1.msra.mxu0 0.0
    %138 = vmatprep.subr.mxu0 0.0
    %139 = vmatpush1.msra.mxu0 0.0
    %140 = vmatprep.subr.mxu0 0.0
    %141 = vmatpush1.msra.mxu0 0.0
    %142 = vmatprep.subr.mxu0 0.0
    %143 = vmatpush1.msra.mxu0 0.0
    %144 = vmatprep.subr.mxu0 0.0
    %145 = vmatpush1.msra.mxu0 0.0
    %146 = vmatprep.subr.mxu0 0.0
    %147 = vmatpush1.msra.mxu0 0.0
    %148 = vmatprep.subr.mxu0 0.0
    %149 = vmatpush1.msra.mxu0 0.0
    %150 = vmatprep.subr.mxu0 0.0
    %151 = vmatpush1.msra.mxu0 0.0
    %152 = vmatprep.subr.mxu0 0.0
    %153 = vmatpush1.msra.mxu0 0.0
    %154 = vmatprep.subr.mxu0 0.0
    %155 = vmatpush1.msra.mxu0 0.0
    %156 = vmatprep.subr.mxu0 0.0
    %157 = vmatpush1.msra.mxu0 0.0
    %158 = vmatprep.subr.mxu0 0.0
    %159 = vmatpush1.msra.mxu0 0.0
    %160 = vmatprep.mubr.f32.mxu0 0.0
    %161 = vmatmul.mubr.f32.gmra.mrb[0].mxu0 %v79
    %v162 = vpop.f32.mrb[0].mxu0
    %v163 = vadd.f32 %v65, %v162
    %v164 = vpop.f32.mrb[0].mxu0
    %v165 = vadd.f32 %v69, %v164
    %166 = vmatprep.mubr.f32.mxu0 0.0
    %167 = vmatmul.mubr.f32.gmra.mrb[0].mxu0 %v82
    %v168 = vpop.f32.mrb[0].mxu0
    %v169 = vadd.f32 %v65, %v168
    %v170 = vpop.f32.mrb[0].mxu0
    %v171 = vadd.f32 %v69, %v170
    %172 = vmatprep.mubr.f32.mxu0 0.0
    %173 = vmatmul.mubr.f32.gmra.mrb[0].mxu0 %v85
    %v174 = vpop.f32.mrb[0].mxu0
    %v175 = vadd.f32 %v65, %v174
    %v176 = vpop.f32.mrb[0].mxu0
    %v177 = vadd.f32 %v69, %v176
    %178 = vmatprep.mubr.f32.mxu0 0.0
    %179 = vmatmul.mubr.f32.gmra.mrb[0].mxu0 %v88
    %v180 = vpop.f32.mrb[0].mxu0
    %v181 = vadd.f32 %v65, %v180
    %v182 = vpop.f32.mrb[0].mxu0
    %v183 = vadd.f32 %v69, %v182
    %184 = vmatprep.mubr.f32.mxu0 0.0
    %185 = vmatmul.mubr.f32.gmra.mrb[0].mxu0 %v91
    %v186 = vpop.f32.mrb[0].mxu0
    %v187 = vadd.f32 %v65, %v186
    %v188 = vpop.f32.mrb[0].mxu0
    %v189 = vadd.f32 %v69, %v188
    %190 = vmatprep.mubr.f32.mxu0 0.0
    %191 = vmatmul.mubr.f32.gmra.mrb[0].mxu0 %v94
    %v192 = vpop.f32.mrb[0].mxu0
    %v193 = vadd.f32 %v65, %v192
    %v194 = vpop.f32.mrb[0].mxu0
    %v195 = vadd.f32 %v69, %v194
    %196 = vdwg.mxu0
    %197 = vmatprep.subr.mxu0 0.0
    %198 = vmatpush1.msra.mxu0 %v50
    %199 = vmatprep.subr.mxu0 0.0
    %200 = vmatpush1.msra.mxu0 %v53
    %201 = vmatprep.subr.mxu0 0.0
    %202 = vmatpush1.msra.mxu0 %v56
    %203 = vmatprep.subr.mxu0 0.0
    %204 = vmatpush1.msra.mxu0 %v59
    %205 = vmatprep.subr.mxu0 0.0
    %206 = vmatpush1.msra.mxu0 0.0
    %207 = vmatprep.subr.mxu0 0.0
    %208 = vmatpush1.msra.mxu0 0.0
    %209 = vmatprep.subr.mxu0 0.0
    %210 = vmatpush1.msra.mxu0 0.0
    %211 = vmatprep.subr.mxu0 0.0
    %212 = vmatpush1.msra.mxu0 0.0
    %213 = vmatprep.subr.mxu0 0.0
    %214 = vmatpush1.msra.mxu0 0.0
    %215 = vmatprep.subr.mxu0 0.0
    %216 = vmatpush1.msra.mxu0 0.0
    %217 = vmatprep.subr.mxu0 0.0
    %218 = vmatpush1.msra.mxu0 0.0
    %219 = vmatprep.subr.mxu0 0.0
    %220 = vmatpush1.msra.mxu0 0.0
    %221 = vmatprep.subr.mxu0 0.0
    %222 = vmatpush1.msra.mxu0 0.0
    %223 = vmatprep.subr.mxu0 0.0
    %224 = vmatpush1.msra.mxu0 0.0
    %225 = vmatprep.subr.mxu0 0.0
    %226 = vmatpush1.msra.mxu0 0.0
    %227 = vmatprep.subr.mxu0 0.0
    %228 = vmatpush1.msra.mxu0 0.0
    %229 = vmatprep.subr.mxu0 0.0
    %230 = vmatpush1.msra.mxu0 0.0
    %231 = vmatprep.subr.mxu0 0.0
    %232 = vmatpush1.msra.mxu0 0.0
    %233 = vmatprep.subr.mxu0 0.0
    %234 = vmatpush1.msra.mxu0 0.0
    %235 = vmatprep.subr.mxu0 0.0
    %236 = vmatpush1.msra.mxu0 0.0
    %237 = vmatprep.subr.mxu0 0.0
    %238 = vmatpush1.msra.mxu0 0.0
    %239 = vmatprep.subr.mxu0 0.0
    %240 = vmatpush1.msra.mxu0 0.0
    %241 = vmatprep.subr.mxu0 0.0
    %242 = vmatpush1.msra.mxu0 0.0
    %243 = vmatprep.subr.mxu0 0.0
    %244 = vmatpush1.msra.mxu0 0.0
    %245 = vmatprep.subr.mxu0 0.0
    %246 = vmatpush1.msra.mxu0 0.0
    %247 = vmatprep.subr.mxu0 0.0
    %248 = vmatpush1.msra.mxu0 0.0
    %249 = vmatprep.subr.mxu0 0.0
    %250 = vmatpush1.msra.mxu0 0.0
    %251 = vmatprep.subr.mxu0 0.0
    %252 = vmatpush1.msra.mxu0 0.0
    %253 = vmatprep.subr.mxu0 0.0
    %254 = vmatpush1.msra.mxu0 0.0
    %255 = vmatprep.subr.mxu0 0.0
    %256 = vmatpush1.msra.mxu0 0.0
    %257 = vmatprep.subr.mxu0 0.0
    %258 = vmatpush1.msra.mxu0 0.0
    %259 = vmatprep.subr.mxu0 0.0
    %260 = vmatpush1.msra.mxu0 0.0
    %261 = vmatprep.mubr.f32.mxu0 0.0
    %262 = vmatmul.mubr.f32.gmra.mrb[0].mxu0 %v79
    %v263 = vpop.f32.mrb[0].mxu0
    %v264 = vadd.f32 %v73, %v263
    %v265 = vpop.f32.mrb[0].mxu0
    %266 = vmatprep.mubr.f32.mxu0 0.0
    %267 = vmatmul.mubr.f32.gmra.mrb[0].mxu0 %v82
    %v268 = vpop.f32.mrb[0].mxu0
    %v269 = vadd.f32 %v73, %v268
    %v270 = vpop.f32.mrb[0].mxu0
    %271 = vmatprep.mubr.f32.mxu0 0.0
    %272 = vmatmul.mubr.f32.gmra.mrb[0].mxu0 %v85
    %v273 = vpop.f32.mrb[0].mxu0
    %v274 = vadd.f32 %v73, %v273
    %v275 = vpop.f32.mrb[0].mxu0
    %276 = vmatprep.mubr.f32.mxu0 0.0
    %277 = vmatmul.mubr.f32.gmra.mrb[0].mxu0 %v88
    %v278 = vpop.f32.mrb[0].mxu0
    %v279 = vadd.f32 %v73, %v278
    %v280 = vpop.f32.mrb[0].mxu0
    %281 = vmatprep.mubr.f32.mxu0 0.0
    %282 = vmatmul.mubr.f32.gmra.mrb[0].mxu0 %v91
    %v283 = vpop.f32.mrb[0].mxu0
    %v284 = vadd.f32 %v73, %v283
    %v285 = vpop.f32.mrb[0].mxu0
    %286 = vmatprep.mubr.f32.mxu0 0.0
    %287 = vmatmul.mubr.f32.gmra.mrb[0].mxu0 %v94
    %v288 = vpop.f32.mrb[0].mxu0
    %v289 = vadd.f32 %v73, %v288
    %v290 = vpop.f32.mrb[0].mxu0
    %291 = vdwg.mxu0
    %292 = vmatprep.subr.mxu0 0.0
    %293 = vmatpush1.xpose.msra.mxu0 %v165
    %294 = vmatprep.subr.mxu0 0.0
    %295 = vmatpush1.xpose.msra.mxu0 %v171
    %296 = vmatprep.subr.mxu0 0.0
    %297 = vmatpush1.xpose.msra.mxu0 %v177
    %298 = vmatprep.subr.mxu0 0.0
    %299 = vmatpush1.xpose.msra.mxu0 0.0
    %300 = vmatprep.subr.mxu0 0.0
    %301 = vmatpush1.xpose.msra.mxu0 0.0
    %302 = vmatprep.subr.mxu0 0.0
    %303 = vmatpush1.xpose.msra.mxu0 0.0
    %304 = vmatprep.subr.mxu0 0.0
    %305 = vmatpush1.xpose.msra.mxu0 0.0
    %306 = vmatprep.subr.mxu0 0.0
    %307 = vmatpush1.xpose.msra.mxu0 0.0
    %308 = vmatprep.subr.mxu0 0.0
    %309 = vmatpush1.xpose.msra.mxu0 0.0
    %310 = vmatprep.subr.mxu0 0.0
    %311 = vmatpush1.xpose.msra.mxu0 0.0
    %312 = vmatprep.subr.mxu0 0.0
    %313 = vmatpush1.xpose.msra.mxu0 0.0
    %314 = vmatprep.subr.mxu0 0.0
    %315 = vmatpush1.xpose.msra.mxu0 0.0
    %316 = vmatprep.subr.mxu0 0.0
    %317 = vmatpush1.xpose.msra.mxu0 0.0
    %318 = vmatprep.subr.mxu0 0.0
    %319 = vmatpush1.xpose.msra.mxu0 0.0
    %320 = vmatprep.subr.mxu0 0.0
    %321 = vmatpush1.xpose.msra.mxu0 0.0
    %322 = vmatprep.subr.mxu0 0.0
    %323 = vmatpush1.xpose.msra.mxu0 0.0
    %324 = vmatprep.subr.mxu0 0.0
    %325 = vmatpush1.xpose.msra.mxu0 0.0
    %326 = vmatprep.subr.mxu0 0.0
    %327 = vmatpush1.xpose.msra.mxu0 0.0
    %328 = vmatprep.subr.mxu0 0.0
    %329 = vmatpush1.xpose.msra.mxu0 0.0
    %330 = vmatprep.subr.mxu0 0.0
    %331 = vmatpush1.xpose.msra.mxu0 0.0
    %332 = vmatprep.subr.mxu0 0.0
    %333 = vmatpush1.xpose.msra.mxu0 0.0
    %334 = vmatprep.subr.mxu0 0.0
    %335 = vmatpush1.xpose.msra.mxu0 0.0
    %336 = vmatprep.subr.mxu0 0.0
    %337 = vmatpush1.xpose.msra.mxu0 0.0
    %338 = vmatprep.subr.mxu0 0.0
    %339 = vmatpush1.xpose.msra.mxu0 0.0
    %340 = vmatprep.subr.mxu0 0.0
    %341 = vmatpush1.xpose.msra.mxu0 0.0
    %342 = vmatprep.subr.mxu0 0.0
    %343 = vmatpush1.xpose.msra.mxu0 0.0
    %344 = vmatprep.subr.mxu0 0.0
    %345 = vmatpush1.xpose.msra.mxu0 0.0
    %346 = vmatprep.subr.mxu0 0.0
    %347 = vmatpush1.xpose.msra.mxu0 0.0
    %348 = vmatprep.subr.mxu0 0.0
    %349 = vmatpush1.xpose.msra.mxu0 0.0
    %350 = vmatprep.subr.mxu0 0.0
    %351 = vmatpush1.xpose.msra.mxu0 0.0
    %352 = vmatprep.subr.mxu0 0.0
    %353 = vmatpush1.xpose.msra.mxu0 0.0
    %354 = vmatprep.subr.mxu0 0.0
    %355 = vmatpush1.xpose.msra.mxu0 0.0
    %356 = vmatprep.mubr.f32.mxu0 0.0
    %357 = vmatmul.mubr.f32.gmra.mrb[0].mxu0 %v163
    %v358 = vpop.f32.mrb[0].mxu0
    %v359 = vadd.f32 0.0, %v358
    %v360 = vpop.f32.mrb[0].mxu0
    %361 = vmatprep.mubr.f32.mxu0 0.0
    %362 = vmatmul.mubr.f32.gmra.mrb[0].mxu0 %v169
    %v363 = vpop.f32.mrb[0].mxu0
    %v364 = vadd.f32 0.0, %v363
    %v365 = vpop.f32.mrb[0].mxu0
    %366 = vmatprep.mubr.f32.mxu0 0.0
    %367 = vmatmul.mubr.f32.gmra.mrb[0].mxu0 %v175
    %v368 = vpop.f32.mrb[0].mxu0
    %v369 = vadd.f32 0.0, %v368
    %v370 = vpop.f32.mrb[0].mxu0
    %371 = vdwg.mxu0
    %372 = vmatprep.subr.mxu0 0.0
    %373 = vmatpush1.xpose.msra.mxu0 %v183
    %374 = vmatprep.subr.mxu0 0.0
    %375 = vmatpush1.xpose.msra.mxu0 %v189
    %376 = vmatprep.subr.mxu0 0.0
    %377 = vmatpush1.xpose.msra.mxu0 %v195
    %378 = vmatprep.subr.mxu0 0.0
    %379 = vmatpush1.xpose.msra.mxu0 0.0
    %380 = vmatprep.subr.mxu0 0.0
    %381 = vmatpush1.xpose.msra.mxu0 0.0
    %382 = vmatprep.subr.mxu0 0.0
    %383 = vmatpush1.xpose.msra.mxu0 0.0
    %384 = vmatprep.subr.mxu0 0.0
    %385 = vmatpush1.xpose.msra.mxu0 0.0
    %386 = vmatprep.subr.mxu0 0.0
    %387 = vmatpush1.xpose.msra.mxu0 0.0
    %388 = vmatprep.subr.mxu0 0.0
    %389 = vmatpush1.xpose.msra.mxu0 0.0
    %390 = vmatprep.subr.mxu0 0.0
    %391 = vmatpush1.xpose.msra.mxu0 0.0
    %392 = vmatprep.subr.mxu0 0.0
    %393 = vmatpush1.xpose.msra.mxu0 0.0
    %394 = vmatprep.subr.mxu0 0.0
    %395 = vmatpush1.xpose.msra.mxu0 0.0
    %396 = vmatprep.subr.mxu0 0.0
    %397 = vmatpush1.xpose.msra.mxu0 0.0
    %398 = vmatprep.subr.mxu0 0.0
    %399 = vmatpush1.xpose.msra.mxu0 0.0
    %400 = vmatprep.subr.mxu0 0.0
    %401 = vmatpush1.xpose.msra.mxu0 0.0
    %402 = vmatprep.subr.mxu0 0.0
    %403 = vmatpush1.xpose.msra.mxu0 0.0
    %404 = vmatprep.subr.mxu0 0.0
    %405 = vmatpush1.xpose.msra.mxu0 0.0
    %406 = vmatprep.subr.mxu0 0.0
    %407 = vmatpush1.xpose.msra.mxu0 0.0
    %408 = vmatprep.subr.mxu0 0.0
    %409 = vmatpush1.xpose.msra.mxu0 0.0
    %410 = vmatprep.subr.mxu0 0.0
    %411 = vmatpush1.xpose.msra.mxu0 0.0
    %412 = vmatprep.subr.mxu0 0.0
    %413 = vmatpush1.xpose.msra.mxu0 0.0
    %414 = vmatprep.subr.mxu0 0.0
    %415 = vmatpush1.xpose.msra.mxu0 0.0
    %416 = vmatprep.subr.mxu0 0.0
    %417 = vmatpush1.xpose.msra.mxu0 0.0
    %418 = vmatprep.subr.mxu0 0.0
    %419 = vmatpush1.xpose.msra.mxu0 0.0
    %420 = vmatprep.subr.mxu0 0.0
    %421 = vmatpush1.xpose.msra.mxu0 0.0
    %422 = vmatprep.subr.mxu0 0.0
    %423 = vmatpush1.xpose.msra.mxu0 0.0
    %424 = vmatprep.subr.mxu0 0.0
    %425 = vmatpush1.xpose.msra.mxu0 0.0
    %426 = vmatprep.subr.mxu0 0.0
    %427 = vmatpush1.xpose.msra.mxu0 0.0
    %428 = vmatprep.subr.mxu0 0.0
    %429 = vmatpush1.xpose.msra.mxu0 0.0
    %430 = vmatprep.subr.mxu0 0.0
    %431 = vmatpush1.xpose.msra.mxu0 0.0
    %432 = vmatprep.subr.mxu0 0.0
    %433 = vmatpush1.xpose.msra.mxu0 0.0
    %434 = vmatprep.subr.mxu0 0.0
    %435 = vmatpush1.xpose.msra.mxu0 0.0
    %436 = vmatprep.mubr.f32.mxu0 0.0
    %437 = vmatmul.mubr.f32.gmra.mrb[0].mxu0 %v181
    %v438 = vpop.f32.mrb[0].mxu0
    %v439 = vadd.f32 0.0, %v438
    %v440 = vpop.f32.mrb[0].mxu0
    %441 = vmatprep.mubr.f32.mxu0 0.0
    %442 = vmatmul.mubr.f32.gmra.mrb[0].mxu0 %v187
    %v443 = vpop.f32.mrb[0].mxu0
    %v444 = vadd.f32 0.0, %v443
    %v445 = vpop.f32.mrb[0].mxu0
    %446 = vmatprep.mubr.f32.mxu0 0.0
    %447 = vmatmul.mubr.f32.gmra.mrb[0].mxu0 %v193
    %v448 = vpop.f32.mrb[0].mxu0
    %v449 = vadd.f32 0.0, %v448
    %v450 = vpop.f32.mrb[0].mxu0
    %451 = vdwg.mxu0
    %v452 = vld [vmem:[%s1] sm:$0x3]
    %v453 = vld [vmem:[%s1 + $0x2] sm:$0x3]
    %v454 = vld [vmem:[%s1 + $0x4] sm:$0x3]
    %v455 = vld [vmem:[%s1 + $0x6] sm:$0x3]
    %v456 = vld [vmem:[%s1 + $0x8] sm:$0x3]
    %v457 = vld [vmem:[%s1 + $0xa] sm:$0x3]
    %vm458 = vnez %v452
    %vm459 = vnez %v453
    %vm460 = vnez %v454
    %vm461 = vnez %v455
    %vm462 = vnez %v456
    %vm463 = vnez %v457
    %v464 = vsel %vm458, 16843009, 0
    %v465 = vsel %vm459, 16843009, 0
    %v466 = vsel %vm460, 16843009, 0
    %v467 = vsel %vm461, 16843009, 0
    %v468 = vsel %vm462, 16843009, 0
    %v469 = vsel %vm463, 16843009, 0
    %v470 = vunpack.c.0.s8 %v464
    %v471 = vunpack.c.0.s8 %v465
    %v472 = vunpack.c.0.s8 %v466
    %v473 = vunpack.c.0.s8 %v467
    %v474 = vunpack.c.0.s8 %v468
    %v475 = vunpack.c.0.s8 %v469
    %vm476 = vcmp.ne.s32.totalorder %v470, 0
    %vm477 = vcmp.ne.s32.totalorder %v471, 0
    %vm478 = vcmp.ne.s32.totalorder %v472, 0
    %vm479 = vcmp.ne.s32.totalorder %v473, 0
    %vm480 = vcmp.ne.s32.totalorder %v474, 0
    %vm481 = vcmp.ne.s32.totalorder %v475, 0
    %v482 = vsel %vm476, -1e+30, %v359
    %v483 = vsel %vm477, -1e+30, %v364
    %v484 = vsel %vm478, -1e+30, %v369
    %v485 = vsel %vm479, -1e+30, %v439
    %v486 = vsel %vm480, -1e+30, %v444
    %v487 = vsel %vm481, -1e+30, %v449
    %vm488 = vcmask 195584
    %v489 = vsel %vm488, %v482, -inf
    %490 = vmax.xlane.f32.xlu0 %v489
    %v491 = vpop.xlane.xlu0 %490
    %v492 = vsel %vm488, %v483, -inf
    %493 = vmax.xlane.f32.xlu0 %v492
    %v494 = vpop.xlane.xlu0 %493
    %v495 = vsel %vm488, %v484, -inf
    %496 = vmax.xlane.f32.xlu0 %v495
    %v497 = vpop.xlane.xlu0 %496
    %v498 = vsel %vm488, %v485, -inf
    %499 = vmax.xlane.f32.xlu0 %v498
    %v500 = vpop.xlane.xlu0 %499
    %v501 = vsel %vm488, %v486, -inf
    %502 = vmax.xlane.f32.xlu0 %v501
    %v503 = vpop.xlane.xlu0 %502
    %v504 = vsel %vm488, %v487, -inf
    %505 = vmax.xlane.f32.xlu0 %v504
    %v506 = vpop.xlane.xlu0 %505
    %v507 = vsub.f32 %v482, %v491
    %v508 = vsub.f32 %v483, %v494
    %v509 = vsub.f32 %v484, %v497
    %v510 = vsub.f32 %v485, %v500
    %v511 = vsub.f32 %v486, %v503
    %v512 = vsub.f32 %v487, %v506
    %v513 = vmul.f32 %v507, 1.442695
    %v514 = vpow.pop %v513
    %v515 = vmul.f32 %v508, 1.442695
    %v516 = vpow.pop %v515
    %v517 = vmul.f32 %v509, 1.442695
    %v518 = vpow.pop %v517
    %v519 = vmul.f32 %v510, 1.442695
    %v520 = vpow.pop %v519
    %v521 = vmul.f32 %v511, 1.442695
    %v522 = vpow.pop %v521
    %v523 = vmul.f32 %v512, 1.442695
    %v524 = vpow.pop %v523
    %v525 = vsel %vm488, %v514, 0.0
    %526 = vadd.xlane.f32.xlu0 %v525
    %v527 = vpop.xlane.xlu0 %526
    %v528 = vsel %vm488, %v516, 0.0
    %529 = vadd.xlane.f32.xlu0 %v528
    %v530 = vpop.xlane.xlu0 %529
    %v531 = vsel %vm488, %v518, 0.0
    %532 = vadd.xlane.f32.xlu0 %v531
    %v533 = vpop.xlane.xlu0 %532
    %v534 = vsel %vm488, %v520, 0.0
    %535 = vadd.xlane.f32.xlu0 %v534
    %v536 = vpop.xlane.xlu0 %535
    %v537 = vsel %vm488, %v522, 0.0
    %538 = vadd.xlane.f32.xlu0 %v537
    %v539 = vpop.xlane.xlu0 %538
    %v540 = vsel %vm488, %v524, 0.0
    %541 = vadd.xlane.f32.xlu0 %v540
    %v542 = vpop.xlane.xlu0 %541
    %v543 = vrcp.pop %v527
    %v544 = vrcp.pop %v530
    %v545 = vrcp.pop %v533
    %v546 = vrcp.pop %v536
    %v547 = vrcp.pop %v539
    %v548 = vrcp.pop %v542
    %v549 = vmul.f32 %v514, %v543
    %v550 = vmul.f32 %v516, %v544
    %v551 = vmul.f32 %v518, %v545
    %v552 = vmul.f32 %v520, %v546
    %v553 = vmul.f32 %v522, %v547
    %v554 = vmul.f32 %v524, %v548
    %v556 = vsel %vm488, %v549, 0
    %v559 = vsel %vm488, %v550, 0
    %v562 = vsel %vm488, %v551, 0
    %564 = vmatprep.subr.mxu0 0.0
    %565 = vmatpush1.msra.mxu0 %v264
    %566 = vmatprep.subr.mxu0 0.0
    %567 = vmatpush1.msra.mxu0 %v269
    %568 = vmatprep.subr.mxu0 0.0
    %569 = vmatpush1.msra.mxu0 %v274
    %570 = vmatprep.subr.mxu0 0.0
    %571 = vmatpush1.msra.mxu0 0.0
    %572 = vmatprep.subr.mxu0 0.0
    %573 = vmatpush1.msra.mxu0 0.0
    %574 = vmatprep.subr.mxu0 0.0
    %575 = vmatpush1.msra.mxu0 0.0
    %576 = vmatprep.subr.mxu0 0.0
    %577 = vmatpush1.msra.mxu0 0.0
    %578 = vmatprep.subr.mxu0 0.0
    %579 = vmatpush1.msra.mxu0 0.0
    %580 = vmatprep.subr.mxu0 0.0
    %581 = vmatpush1.msra.mxu0 0.0
    %582 = vmatprep.subr.mxu0 0.0
    %583 = vmatpush1.msra.mxu0 0.0
    %584 = vmatprep.subr.mxu0 0.0
    %585 = vmatpush1.msra.mxu0 0.0
    %586 = vmatprep.subr.mxu0 0.0
    %587 = vmatpush1.msra.mxu0 0.0
    %588 = vmatprep.subr.mxu0 0.0
    %589 = vmatpush1.msra.mxu0 0.0
    %590 = vmatprep.subr.mxu0 0.0
    %591 = vmatpush1.msra.mxu0 0.0
    %592 = vmatprep.subr.mxu0 0.0
    %593 = vmatpush1.msra.mxu0 0.0
    %594 = vmatprep.subr.mxu0 0.0
    %595 = vmatpush1.msra.mxu0 0.0
    %596 = vmatprep.subr.mxu0 0.0
    %597 = vmatpush1.msra.mxu0 0.0
    %598 = vmatprep.subr.mxu0 0.0
    %599 = vmatpush1.msra.mxu0 0.0
    %600 = vmatprep.subr.mxu0 0.0
    %601 = vmatpush1.msra.mxu0 0.0
    %602 = vmatprep.subr.mxu0 0.0
    %603 = vmatpush1.msra.mxu0 0.0
    %604 = vmatprep.subr.mxu0 0.0
    %605 = vmatpush1.msra.mxu0 0.0
    %606 = vmatprep.subr.mxu0 0.0
    %607 = vmatpush1.msra.mxu0 0.0
    %608 = vmatprep.subr.mxu0 0.0
    %609 = vmatpush1.msra.mxu0 0.0
    %610 = vmatprep.subr.mxu0 0.0
    %611 = vmatpush1.msra.mxu0 0.0
    %612 = vmatprep.subr.mxu0 0.0
    %613 = vmatpush1.msra.mxu0 0.0
    %614 = vmatprep.subr.mxu0 0.0
    %615 = vmatpush1.msra.mxu0 0.0
    %616 = vmatprep.subr.mxu0 0.0
    %617 = vmatpush1.msra.mxu0 0.0
    %618 = vmatprep.subr.mxu0 0.0
    %619 = vmatpush1.msra.mxu0 0.0
    %620 = vmatprep.subr.mxu0 0.0
    %621 = vmatpush1.msra.mxu0 0.0
    %622 = vmatprep.subr.mxu0 0.0
    %623 = vmatpush1.msra.mxu0 0.0
    %624 = vmatprep.subr.mxu0 0.0
    %625 = vmatpush1.msra.mxu0 0.0
    %626 = vmatprep.subr.mxu0 0.0
    %627 = vmatpush1.msra.mxu0 0.0
    %628 = vmatprep.mubr.f32.mxu0 0.0
    %629 = vmatmul.mubr.f32.gmra.mrb[0].mxu0 %v556
    %v630 = vpop.f32.mrb[0].mxu0
    %v631 = vadd.f32 0.0, %v630
    %v632 = vpop.f32.mrb[0].mxu0
    %633 = vmatprep.mubr.f32.mxu0 0.0
    %634 = vmatmul.mubr.f32.gmra.mrb[0].mxu0 %v559
    %v635 = vpop.f32.mrb[0].mxu0
    %v636 = vadd.f32 0.0, %v635
    %v637 = vpop.f32.mrb[0].mxu0
    %638 = vmatprep.mubr.f32.mxu0 0.0
    %639 = vmatmul.mubr.f32.gmra.mrb[0].mxu0 %v562
    %v640 = vpop.f32.mrb[0].mxu0
    %v641 = vadd.f32 0.0, %v640
    %v642 = vpop.f32.mrb[0].mxu0
    %643 = vdwg.mxu0
    %v645 = vsel %vm488, %v552, 0
    %v648 = vsel %vm488, %v553, 0
    %v651 = vsel %vm488, %v554, 0
    %653 = vmatprep.subr.mxu0 0.0
    %654 = vmatpush1.msra.mxu0 %v279
    %655 = vmatprep.subr.mxu0 0.0
    %656 = vmatpush1.msra.mxu0 %v284
    %657 = vmatprep.subr.mxu0 0.0
    %658 = vmatpush1.msra.mxu0 %v289
    %659 = vmatprep.subr.mxu0 0.0
    %660 = vmatpush1.msra.mxu0 0.0
    %661 = vmatprep.subr.mxu0 0.0
    %662 = vmatpush1.msra.mxu0 0.0
    %663 = vmatprep.subr.mxu0 0.0
    %664 = vmatpush1.msra.mxu0 0.0
    %665 = vmatprep.subr.mxu0 0.0
    %666 = vmatpush1.msra.mxu0 0.0
    %667 = vmatprep.subr.mxu0 0.0
    %668 = vmatpush1.msra.mxu0 0.0
    %669 = vmatprep.subr.mxu0 0.0
    %670 = vmatpush1.msra.mxu0 0.0
    %671 = vmatprep.subr.mxu0 0.0
    %672 = vmatpush1.msra.mxu0 0.0
    %673 = vmatprep.subr.mxu0 0.0
    %674 = vmatpush1.msra.mxu0 0.0
    %675 = vmatprep.subr.mxu0 0.0
    %676 = vmatpush1.msra.mxu0 0.0
    %677 = vmatprep.subr.mxu0 0.0
    %678 = vmatpush1.msra.mxu0 0.0
    %679 = vmatprep.subr.mxu0 0.0
    %680 = vmatpush1.msra.mxu0 0.0
    %681 = vmatprep.subr.mxu0 0.0
    %682 = vmatpush1.msra.mxu0 0.0
    %683 = vmatprep.subr.mxu0 0.0
    %684 = vmatpush1.msra.mxu0 0.0
    %685 = vmatprep.subr.mxu0 0.0
    %686 = vmatpush1.msra.mxu0 0.0
    %687 = vmatprep.subr.mxu0 0.0
    %688 = vmatpush1.msra.mxu0 0.0
    %689 = vmatprep.subr.mxu0 0.0
    %690 = vmatpush1.msra.mxu0 0.0
    %691 = vmatprep.subr.mxu0 0.0
    %692 = vmatpush1.msra.mxu0 0.0
    %693 = vmatprep.subr.mxu0 0.0
    %694 = vmatpush1.msra.mxu0 0.0
    %695 = vmatprep.subr.mxu0 0.0
    %696 = vmatpush1.msra.mxu0 0.0
    %697 = vmatprep.subr.mxu0 0.0
    %698 = vmatpush1.msra.mxu0 0.0
    %699 = vmatprep.subr.mxu0 0.0
    %700 = vmatpush1.msra.mxu0 0.0
    %701 = vmatprep.subr.mxu0 0.0
    %702 = vmatpush1.msra.mxu0 0.0
    %703 = vmatprep.subr.mxu0 0.0
    %704 = vmatpush1.msra.mxu0 0.0
    %705 = vmatprep.subr.mxu0 0.0
    %706 = vmatpush1.msra.mxu0 0.0
    %707 = vmatprep.subr.mxu0 0.0
    %708 = vmatpush1.msra.mxu0 0.0
    %709 = vmatprep.subr.mxu0 0.0
    %710 = vmatpush1.msra.mxu0 0.0
    %711 = vmatprep.subr.mxu0 0.0
    %712 = vmatpush1.msra.mxu0 0.0
    %713 = vmatprep.subr.mxu0 0.0
    %714 = vmatpush1.msra.mxu0 0.0
    %715 = vmatprep.subr.mxu0 0.0
    %716 = vmatpush1.msra.mxu0 0.0
    %717 = vmatprep.mubr.f32.mxu0 0.0
    %718 = vmatmul.mubr.f32.gmra.mrb[0].mxu0 %v645
    %v719 = vpop.f32.mrb[0].mxu0
    %v720 = vadd.f32 0.0, %v719
    %v721 = vpop.f32.mrb[0].mxu0
    %722 = vmatprep.mubr.f32.mxu0 0.0
    %723 = vmatmul.mubr.f32.gmra.mrb[0].mxu0 %v648
    %v724 = vpop.f32.mrb[0].mxu0
    %v725 = vadd.f32 0.0, %v724
    %v726 = vpop.f32.mrb[0].mxu0
    %727 = vmatprep.mubr.f32.mxu0 0.0
    %728 = vmatmul.mubr.f32.gmra.mrb[0].mxu0 %v651
    %v729 = vpop.f32.mrb[0].mxu0
    %v730 = vadd.f32 0.0, %v729
    %v731 = vpop.f32.mrb[0].mxu0
    %732 = vdwg.mxu0
    %vm733 = vcmask 130048
    %v734 = vsel %vm733, %v631, 0.0
    %735 = vadd.xlane.f32.xlu0 %v734
    %v736 = vpop.xlane.xlu0 %735
    %v737 = vsel %vm733, %v636, 0.0
    %738 = vadd.xlane.f32.xlu0 %v737
    %v739 = vpop.xlane.xlu0 %738
    %v740 = vsel %vm733, %v641, 0.0
    %741 = vadd.xlane.f32.xlu0 %v740
    %v742 = vpop.xlane.xlu0 %741
    %v743 = vsel %vm733, %v720, 0.0
    %744 = vadd.xlane.f32.xlu0 %v743
    %v745 = vpop.xlane.xlu0 %744
    %v746 = vsel %vm733, %v725, 0.0
    %747 = vadd.xlane.f32.xlu0 %v746
    %v748 = vpop.xlane.xlu0 %747
    %v749 = vsel %vm733, %v730, 0.0
    %750 = vadd.xlane.f32.xlu0 %v749
    %v751 = vpop.xlane.xlu0 %750
    %v752 = vrcp.pop 16.0
    %v753 = vmul.f32 %v736, %v752
    %v754 = vmul.f32 %v739, %v752
    %v755 = vmul.f32 %v742, %v752
    %v756 = vmul.f32 %v745, %v752
    %v757 = vmul.f32 %v748, %v752
    %v758 = vmul.f32 %v751, %v752
    %v759 = vsub.f32 %v631, %v753
    %v760 = vsub.f32 %v636, %v754
    %v761 = vsub.f32 %v641, %v755
    %v762 = vsub.f32 %v720, %v756
    %v763 = vsub.f32 %v725, %v757
    %v764 = vsub.f32 %v730, %v758
    %v765 = vmul.f32 %v759, %v759
    %v766 = vmul.f32 %v760, %v760
    %v767 = vmul.f32 %v761, %v761
    %v768 = vmul.f32 %v762, %v762
    %v769 = vmul.f32 %v763, %v763
    %v770 = vmul.f32 %v764, %v764
    %v771 = vsel %vm733, %v765, 0.0
    %772 = vadd.xlane.f32.xlu0 %v771
    %v773 = vpop.xlane.xlu0 %772
    %v774 = vsel %vm733, %v766, 0.0
    %775 = vadd.xlane.f32.xlu0 %v774
    %v776 = vpop.xlane.xlu0 %775
    %v777 = vsel %vm733, %v767, 0.0
    %778 = vadd.xlane.f32.xlu0 %v777
    %v779 = vpop.xlane.xlu0 %778
    %v780 = vsel %vm733, %v768, 0.0
    %781 = vadd.xlane.f32.xlu0 %v780
    %v782 = vpop.xlane.xlu0 %781
    %v783 = vsel %vm733, %v769, 0.0
    %784 = vadd.xlane.f32.xlu0 %v783
    %v785 = vpop.xlane.xlu0 %784
    %v786 = vsel %vm733, %v770, 0.0
    %787 = vadd.xlane.f32.xlu0 %v786
    %v788 = vpop.xlane.xlu0 %787
    %v789 = vmul.f32 %v773, %v752
    %v790 = vmul.f32 %v776, %v752
    %v791 = vmul.f32 %v779, %v752
    %v792 = vmul.f32 %v782, %v752
    %v793 = vmul.f32 %v785, %v752
    %v794 = vmul.f32 %v788, %v752
    %v795 = vadd.f32 %v789, 1e-05
    %v796 = vadd.f32 %v790, 1e-05
    %v797 = vadd.f32 %v791, 1e-05
    %v798 = vadd.f32 %v792, 1e-05
    %v799 = vadd.f32 %v793, 1e-05
    %v800 = vadd.f32 %v794, 1e-05
    %v801 = vrsqrt.pop %v795
    %v802 = vrsqrt.pop %v796
    %v803 = vrsqrt.pop %v797
    %v804 = vrsqrt.pop %v798
    %v805 = vrsqrt.pop %v799
    %v806 = vrsqrt.pop %v800
    %v807 = vmul.f32 %v759, %v801
    %v808 = vmul.f32 %v760, %v802
    %v809 = vmul.f32 %v761, %v803
    %v810 = vmul.f32 %v762, %v804
    %v811 = vmul.f32 %v763, %v805
    %v812 = vmul.f32 %v764, %v806
    %v813 = vld [vmem:[%s5] sm:$0x1]
    %v815 = vlaneseq
    %v816 = vshrl.u32 %v815, 7
    %v817 = vsub.s32 0, %v816
    %v818 = vrot.slane %v813, %v817
    %v820 = vmul.f32 %v807, %v818
    %v821 = vmul.f32 %v808, %v818
    %v822 = vmul.f32 %v809, %v818
    %v823 = vmul.f32 %v810, %v818
    %v824 = vmul.f32 %v811, %v818
    %v825 = vmul.f32 %v812, %v818
    %v826 = vld [vmem:[%s6] sm:$0x1]
    %v828 = vlaneseq
    %v829 = vshrl.u32 %v828, 7
    %v830 = vsub.s32 0, %v829
    %v831 = vrot.slane %v826, %v830
    %v833 = vadd.f32 %v820, %v831
    %v834 = vadd.f32 %v821, %v831
    %v835 = vadd.f32 %v822, %v831
    %v836 = vadd.f32 %v823, %v831
    %v837 = vadd.f32 %v824, %v831
    %v838 = vadd.f32 %v825, %v831
    %v839 = vmax.f32 %v833, 0.0
    %v840 = vmax.f32 %v834, 0.0
    %v841 = vmax.f32 %v835, 0.0
    %v842 = vmax.f32 %v836, 0.0
    %v843 = vmax.f32 %v837, 0.0
    %v844 = vmax.f32 %v838, 0.0
    %v845 = vld [vmem:[%s4] sm:$0xff]
    %v846 = vld [vmem:[%s4 + $0x8] sm:$0xff]
    %v848 = vsel %vm733, %v839, 0
    %v851 = vsel %vm733, %v840, 0
    %v854 = vsel %vm733, %v841, 0
    %v857 = vsel %vm733, %v842, 0
    %v860 = vsel %vm733, %v843, 0
    %v863 = vsel %vm733, %v844, 0
    %865 = vmatprep.subr.mxu0 0.0
    %866 = vmatpush1.msra.mxu0 %v845
    %867 = vmatprep.subr.mxu0 0.0
    %868 = vmatpush1.msra.mxu0 %v846
    %869 = vmatprep.subr.mxu0 0.0
    %870 = vmatpush1.msra.mxu0 0.0
    %871 = vmatprep.subr.mxu0 0.0
    %872 = vmatpush1.msra.mxu0 0.0
    %873 = vmatprep.subr.mxu0 0.0
    %874 = vmatpush1.msra.mxu0 0.0
    %875 = vmatprep.subr.mxu0 0.0
    %876 = vmatpush1.msra.mxu0 0.0
    %877 = vmatprep.subr.mxu0 0.0
    %878 = vmatpush1.msra.mxu0 0.0
    %879 = vmatprep.subr.mxu0 0.0
    %880 = vmatpush1.msra.mxu0 0.0
    %881 = vmatprep.subr.mxu0 0.0
    %882 = vmatpush1.msra.mxu0 0.0
    %883 = vmatprep.subr.mxu0 0.0
    %884 = vmatpush1.msra.mxu0 0.0
    %885 = vmatprep.subr.mxu0 0.0
    %886 = vmatpush1.msra.mxu0 0.0
    %887 = vmatprep.subr.mxu0 0.0
    %888 = vmatpush1.msra.mxu0 0.0
    %889 = vmatprep.subr.mxu0 0.0
    %890 = vmatpush1.msra.mxu0 0.0
    %891 = vmatprep.subr.mxu0 0.0
    %892 = vmatpush1.msra.mxu0 0.0
    %893 = vmatprep.subr.mxu0 0.0
    %894 = vmatpush1.msra.mxu0 0.0
    %895 = vmatprep.subr.mxu0 0.0
    %896 = vmatpush1.msra.mxu0 0.0
    %897 = vmatprep.subr.mxu0 0.0
    %898 = vmatpush1.msra.mxu0 0.0
    %899 = vmatprep.subr.mxu0 0.0
    %900 = vmatpush1.msra.mxu0 0.0
    %901 = vmatprep.subr.mxu0 0.0
    %902 = vmatpush1.msra.mxu0 0.0
    %903 = vmatprep.subr.mxu0 0.0
    %904 = vmatpush1.msra.mxu0 0.0
    %905 = vmatprep.subr.mxu0 0.0
    %906 = vmatpush1.msra.mxu0 0.0
    %907 = vmatprep.subr.mxu0 0.0
    %908 = vmatpush1.msra.mxu0 0.0
    %909 = vmatprep.subr.mxu0 0.0
    %910 = vmatpush1.msra.mxu0 0.0
    %911 = vmatprep.subr.mxu0 0.0
    %912 = vmatpush1.msra.mxu0 0.0
    %913 = vmatprep.subr.mxu0 0.0
    %914 = vmatpush1.msra.mxu0 0.0
    %915 = vmatprep.subr.mxu0 0.0
    %916 = vmatpush1.msra.mxu0 0.0
    %917 = vmatprep.subr.mxu0 0.0
    %918 = vmatpush1.msra.mxu0 0.0
    %919 = vmatprep.subr.mxu0 0.0
    %920 = vmatpush1.msra.mxu0 0.0
    %921 = vmatprep.subr.mxu0 0.0
    %922 = vmatpush1.msra.mxu0 0.0
    %923 = vmatprep.subr.mxu0 0.0
    %924 = vmatpush1.msra.mxu0 0.0
    %925 = vmatprep.subr.mxu0 0.0
    %926 = vmatpush1.msra.mxu0 0.0
    %927 = vmatprep.subr.mxu0 0.0
    %928 = vmatpush1.msra.mxu0 0.0
    %929 = vmatprep.mubr.f32.mxu0 0.0
    %930 = vmatmul.mubr.f32.gmra.mrb[0].mxu0 %v848
    %v931 = vpop.f32.mrb[0].mxu0
    %v932 = vadd.f32 0.0, %v931
    %v933 = vpop.f32.mrb[0].mxu0
    %934 = vmatprep.mubr.f32.mxu0 0.0
    %935 = vmatmul.mubr.f32.gmra.mrb[0].mxu0 %v851
    %v936 = vpop.f32.mrb[0].mxu0
    %v937 = vadd.f32 0.0, %v936
    %v938 = vpop.f32.mrb[0].mxu0
    %939 = vmatprep.mubr.f32.mxu0 0.0
    %940 = vmatmul.mubr.f32.gmra.mrb[0].mxu0 %v854
    %v941 = vpop.f32.mrb[0].mxu0
    %v942 = vadd.f32 0.0, %v941
    %v943 = vpop.f32.mrb[0].mxu0
    %944 = vmatprep.mubr.f32.mxu0 0.0
    %945 = vmatmul.mubr.f32.gmra.mrb[0].mxu0 %v857
    %v946 = vpop.f32.mrb[0].mxu0
    %v947 = vadd.f32 0.0, %v946
    %v948 = vpop.f32.mrb[0].mxu0
    %949 = vmatprep.mubr.f32.mxu0 0.0
    %950 = vmatmul.mubr.f32.gmra.mrb[0].mxu0 %v860
    %v951 = vpop.f32.mrb[0].mxu0
    %v952 = vadd.f32 0.0, %v951
    %v953 = vpop.f32.mrb[0].mxu0
    %954 = vmatprep.mubr.f32.mxu0 0.0
    %955 = vmatmul.mubr.f32.gmra.mrb[0].mxu0 %v863
    %v956 = vpop.f32.mrb[0].mxu0
    %v957 = vadd.f32 0.0, %v956
    %v958 = vpop.f32.mrb[0].mxu0
    %959 = vdwg.mxu0
    %960 = vst.msk [vmem:[%s7] sm:$0xff] %vm77, %v932
    %961 = vst.msk [vmem:[%s7 + $0x8] sm:$0xff] %vm77, %v937
    %962 = vst.msk [vmem:[%s7 + $0x10] sm:$0xff] %vm77, %v942
    %963 = vst.msk [vmem:[%s7 + $0x18] sm:$0xff] %vm77, %v947
    %964 = vst.msk [vmem:[%s7 + $0x20] sm:$0xff] %vm77, %v952
    %965 = vst.msk [vmem:[%s7 + $0x28] sm:$0xff] %vm77, %v957
    // Predicated region
    $region34: #{tpu_custom_call.1} parent=1 // pred_check
      _
    $region35: #{tpu_custom_call.1} parent=1 // pred_check_branch
      %967 = sbr.rel (0) target = $region37
    $region36: #{tpu_custom_call.1} parent=1 // pred_region
      _
    $region37: #{tpu_custom_call.1} parent=1 // pred_fallthru
      _
    // Predicated region
    $region38: #{tpu_custom_call.1} parent=1 // pred_check
      _
    $region39: #{tpu_custom_call.1} parent=1 // pred_check_branch
      %969 = sbr.rel (0) target = $region41
    $region40: #{tpu_custom_call.1} parent=1 // pred_region
      _
    $region41: #{tpu_custom_call.1} parent=1 // pred_fallthru
      _
    %970 = vsyncpa [#allocation3], 1

</llo_original>
